<compile_context>
chip_gen: v5e
topology: v5e:2x2
jax: 0.10.0
libtpu: 0.0.40
codegen_flags: <defaults>
</compile_context>

<pallas_src>
import functools

import jax
import jax.numpy as jnp
from jax.experimental import pallas as pl
from jax.experimental.pallas import tpu as pltpu


def _round_up(n, m):
    return ((n + m - 1) // m) * m


# ---------------------------------------------------------------------------
# Kernel: one batch tile of the full VAE forward.
#   encoder : h = relu(x @ W1 + b1);  [mu | logvar] = h @ Wh + bh  (fused head)
#   sample  : z = exp(0.5*logvar) * (0.01*eps) + mu
#   decoder : hd = relu(z @ Wd + bd); logits = hd @ W2 + b2
#   softmax over each ltoken-wide group (== nn.Softmax(dim=2) on the 3-D view)
# ---------------------------------------------------------------------------
def _vae_kernel(maxlen, ltoken, latent_pad,
                x_ref, eps_ref,
                w1_ref, b1_ref,
                wh_ref, bh_ref,
                wd_ref, bd_ref,
                w2_ref, b2_ref,
                newx_ref, muvar_ref):
    f32 = jnp.float32
    bf16 = jnp.bfloat16

    # ---- encoder (bf16 operands, f32 accumulation on the MXU) ----
    h = jnp.dot(x_ref[...], w1_ref[...], preferred_element_type=f32) + b1_ref[...]
    h = jnp.maximum(h, 0.0)

    muvar = jnp.dot(h.astype(bf16), wh_ref[...], preferred_element_type=f32) + bh_ref[...]
    mu = muvar[:, :latent_pad]
    logvar = muvar[:, latent_pad:]

    # ---- reparameterization: exp(0.5*logvar) * (0.01*eps) + mu (f32) ----
    z = jnp.exp(0.5 * logvar) * (0.01 * eps_ref[...]) + mu

    # ---- decoder ----
    hd = jnp.dot(z.astype(bf16), wd_ref[...], preferred_element_type=f32) + bd_ref[...]
    hd = jnp.maximum(hd, 0.0)
    logits = jnp.dot(hd.astype(bf16), w2_ref[...], preferred_element_type=f32) + b2_ref[...]

    # ---- softmax over each ltoken-wide token group (dim=2 of the 3-D view) ----
    tb = logits.shape[0]
    l3 = logits.reshape(tb, maxlen, ltoken)
    m = jnp.max(l3, axis=-1, keepdims=True)
    e = jnp.exp(l3 - m)
    sm = e / jnp.sum(e, axis=-1, keepdims=True)

    # lane-dense flat stores; the (B, maxlen, ltoken) reshape is wrapper-side
    newx_ref[...] = sm.reshape(tb, maxlen * ltoken).astype(newx_ref.dtype)
    muvar_ref[...] = muvar.astype(muvar_ref.dtype)


# ---------------------------------------------------------------------------
# Parameter packing: pad hidden->128-multiple, latent->64-multiple (so the
# fused [mu|logvar] head is a 128-multiple wide), fuse the mu/logvar heads,
# and cast matmul weights to bf16 (biases stay f32). Zero padding is exact.
# ---------------------------------------------------------------------------
def pack_params(params, *, maxlen, ltoken, latent_space, hidden=64):
    D = maxlen * ltoken
    hp = _round_up(hidden, 128)
    lp = _round_up(latent_space, 64)

    def pad(a, rows, cols):
        return jnp.pad(a, ((0, rows - a.shape[0]), (0, cols - a.shape[1])))

    w1 = pad(params["w1"], D, hp).astype(jnp.bfloat16)
    b1 = pad(params["b1"], 1, hp)
    wh = jnp.concatenate(
        [pad(params["wmu"], hp, lp), pad(params["wvar"], hp, lp)], axis=1
    ).astype(jnp.bfloat16)
    bh = jnp.concatenate([pad(params["bmu"], 1, lp), pad(params["bvar"], 1, lp)], axis=1)
    wd = pad(params["wd"], lp, hp).astype(jnp.bfloat16)
    bd = pad(params["bd"], 1, hp)
    w2 = pad(params["w2"], hp, D).astype(jnp.bfloat16)
    b2 = params["b2"]
    return dict(w1=w1, b1=b1, wh=wh, bh=bh, wd=wd, bd=bd, w2=w2, b2=b2)


def _pick_tile_b(batch, d, hp, lp, budget_bytes=40 * 2**20):
    """Largest batch tile (multiple of 16, <=512) that fits the VMEM budget."""
    # resident weights: bf16 matrices + f32 biases (single copy)
    w_bytes = 2 * (d * hp + hp * 2 * lp + lp * hp + hp * d) + 4 * (2 * hp + 2 * lp + d)
    tb = min(512, _round_up(batch, 16))
    while tb > 16:
        # double-buffered streaming tiles: x(bf16), eps(f32), newx(f32), muvar(f32)
        stream = 2 * tb * (2 * d + 4 * lp + 4 * d + 4 * 2 * lp)
        # rough in-kernel f32 temporaries (h, hd, logits/exp/softmax, z)
        scratch = tb * 4 * (2 * hp + 2 * lp + 3 * d)
        if w_bytes + stream + scratch <= budget_bytes:
            break
        tb = max(16, _round_up(tb // 2, 16))
    return max(16, tb)


def molecule_vae_forward(x, eps, packed, *, maxlen, ltoken, latent_space):
    """x: (B, maxlen, ltoken) f32; eps: (B, latent_space) standard normal."""
    B = x.shape[0]
    D = maxlen * ltoken
    hp = packed["w1"].shape[1]
    lp = packed["wh"].shape[1] // 2

    tb = _pick_tile_b(B, D, hp, lp)
    bp = _round_up(B, tb)

    x_flat = x.reshape(B, D).astype(jnp.bfloat16)            # torch view(-1, ltoken*maxlen)
    x_pad = jnp.pad(x_flat, ((0, bp - B), (0, 0)))
    eps_pad = jnp.pad(eps.astype(jnp.float32),
                      ((0, bp - B), (0, lp - eps.shape[1])))

    def row_spec(width):
        return pl.BlockSpec((tb, width), lambda i: (i, 0))

    def const_spec(arr):
        return pl.BlockSpec(arr.shape, lambda i: (0, 0))     # VMEM-resident params

    kernel = functools.partial(_vae_kernel, maxlen, ltoken, lp)

    flops = 2 * bp * (D * hp + hp * 2 * lp + lp * hp + hp * D)
    transcendentals = bp * (lp + maxlen * ltoken)
    bytes_accessed = (x_pad.size * 2 + eps_pad.size * 4
                      + sum(int(v.size) * v.dtype.itemsize for v in packed.values())
                      + bp * D * 4 + bp * 2 * lp * 4)

    newx_flat, muvar = pl.pallas_call(
        kernel,
        out_shape=(jax.ShapeDtypeStruct((bp, D), jnp.float32),        # softmax(logits), flat
                   jax.ShapeDtypeStruct((bp, 2 * lp), jnp.float32)),  # [mu | logvar]
        grid_spec=pltpu.PrefetchScalarGridSpec(
            num_scalar_prefetch=0,
            grid=(bp // tb,),
            in_specs=[
                row_spec(D),                      # x
                row_spec(lp),                     # eps
                const_spec(packed["w1"]), const_spec(packed["b1"]),
                const_spec(packed["wh"]), const_spec(packed["bh"]),
                const_spec(packed["wd"]), const_spec(packed["bd"]),
                const_spec(packed["w2"]), const_spec(packed["b2"]),
            ],
            out_specs=(row_spec(D), row_spec(2 * lp)),
        ),
        compiler_params=pltpu.CompilerParams(
            dimension_semantics=("parallel",),          # v7x: shard batch tiles over 2 TCs
            vmem_limit_bytes=48 * 1024 * 1024,          # explicit, fits v7x 64 MiB VMEM
        ),
        cost_estimate=pl.CostEstimate(
            flops=flops, transcendentals=transcendentals, bytes_accessed=bytes_accessed),
    )(x_pad, eps_pad,
      packed["w1"], packed["b1"], packed["wh"], packed["bh"],
      packed["wd"], packed["bd"], packed["w2"], packed["b2"])

    newx = newx_flat[:B].reshape(B, maxlen, ltoken)
    mu = muvar[:B, :latent_space]
    logvar = muvar[:B, lp:lp + latent_space]
    return newx, mu, logvar


# ---------------------------------------------------------------------------
# Reference / init (pure JAX, f32, original un-padded layout)
# ---------------------------------------------------------------------------
def init_params(key, *, maxlen, ltoken, latent_space, hidden=64):
    """nn.Linear-style init; weights stored (in, out), biases (1, out)."""
    D = maxlen * ltoken

    def linear(k, fan_in, fan_out):
        kw, kb = jax.random.split(k)
        bound = 1.0 / jnp.sqrt(fan_in)
        w = jax.random.uniform(kw, (fan_in, fan_out), jnp.float32, -bound, bound)
        b = jax.random.uniform(kb, (1, fan_out), jnp.float32, -bound, bound)
        return w, b

    k1, k2, k3, k4, k5 = jax.random.split(key, 5)
    w1, b1 = linear(k1, D, hidden)                  # dense1
    wmu, bmu = linear(k2, hidden, latent_space)     # aver
    wvar, bvar = linear(k3, hidden, latent_space)   # var
    wd, bd = linear(k4, latent_space, hidden)       # dense
    w2, b2 = linear(k5, hidden, D)                  # dense2
    return dict(w1=w1, b1=b1, wmu=wmu, bmu=bmu, wvar=wvar, bvar=bvar,
                wd=wd, bd=bd, w2=w2, b2=b2)


def reference_forward(x, eps, params, *, maxlen, ltoken):
    B = x.shape[0]
    xf = x.reshape(B, maxlen * ltoken)
    h = jax.nn.relu(xf @ params["w1"] + params["b1"])
    mu = h @ params["wmu"] + params["bmu"]
    logvar = h @ params["wvar"] + params["bvar"]
    z = jnp.exp(0.5 * logvar) * (0.01 * eps) + mu
    hd = jax.nn.relu(z @ params["wd"] + params["bd"])
    logits = (hd @ params["w2"] + params["b2"]).reshape(B, maxlen, ltoken)
    return jax.nn.softmax(logits, axis=2), mu, logvar


if __name__ == "__main__":
    B, MAXLEN, LTOKEN, LATENT = 2, 8, 16, 32

    key = jax.random.PRNGKey(0)
    kx, keps, kp = jax.random.split(key, 3)

    # one-hot SMILES-token input, as the module expects
    tokens = jax.random.randint(kx, (B, MAXLEN), 0, LTOKEN)
    x = jax.nn.one_hot(tokens, LTOKEN, dtype=jnp.float32)
    # torch.randn_like noise is supplied as an explicit input for determinism
    eps = jax.random.normal(keps, (B, LATENT), jnp.float32)

    params = init_params(kp, maxlen=MAXLEN, ltoken=LTOKEN, latent_space=LATENT)
    packed = pack_params(params, maxlen=MAXLEN, ltoken=LTOKEN, latent_space=LATENT)

    fwd = jax.jit(functools.partial(
        molecule_vae_forward, maxlen=MAXLEN, ltoken=LTOKEN, latent_space=LATENT))
    newx, mu, logvar = fwd(x, eps, packed)
    jax.block_until_ready((newx, mu, logvar))

    # correctness vs pure-JAX f32 reference (bf16 matmul inputs -> relaxed tol)
    rnewx, rmu, rlogvar = reference_forward(x, eps, params, maxlen=MAXLEN, ltoken=LTOKEN)
    assert newx.shape == (B, MAXLEN, LTOKEN)
    assert mu.shape == (B, LATENT) and logvar.shape == (B, LATENT)
    assert bool(jnp.all(jnp.isfinite(newx)))
    assert jnp.allclose(newx, rnewx, atol=2e-2, rtol=2e-2)
    assert jnp.allclose(mu, rmu, atol=2e-2, rtol=2e-2)
    assert jnp.allclose(logvar, rlogvar, atol=2e-2, rtol=2e-2)

    print("KERNEL_OK")
</pallas_src>

<mosaic_0001>
module attributes {stable_mosaic.version = 11 : i64} {
  func.func @_vae_kernel(%arg0: i32, %arg1: memref<16x128xbf16, #tpu.memory_space<vmem>>, %arg2: memref<16x64xf32, #tpu.memory_space<vmem>>, %arg3: memref<128x128xbf16, #tpu.memory_space<vmem>>, %arg4: memref<1x128xf32, #tpu.memory_space<vmem>>, %arg5: memref<128x128xbf16, #tpu.memory_space<vmem>>, %arg6: memref<1x128xf32, #tpu.memory_space<vmem>>, %arg7: memref<64x128xbf16, #tpu.memory_space<vmem>>, %arg8: memref<1x128xf32, #tpu.memory_space<vmem>>, %arg9: memref<128x128xbf16, #tpu.memory_space<vmem>>, %arg10: memref<1x128xf32, #tpu.memory_space<vmem>>, %arg11: memref<16x128xf32, #tpu.memory_space<vmem>>, %arg12: memref<16x128xf32, #tpu.memory_space<vmem>>) attributes {dimension_semantics = [#tpu.dimension_semantics<parallel>], iteration_bounds = array<i64: 1>, scalar_prefetch = 0 : i64, scratch_operands = 0 : i64, tpu.core_type = #tpu.core_type<tc>, window_params = [{transform_indices = @transform_0, window_bounds = array<i64: 16, 128>}, {transform_indices = @transform_1, window_bounds = array<i64: 16, 64>}, {pipeline_mode = #tpu.pipeline_mode<synchronous>, transform_indices = @transform_2, window_bounds = array<i64: 128, 128>}, {pipeline_mode = #tpu.pipeline_mode<synchronous>, transform_indices = @transform_3, window_bounds = array<i64: 1, 128>}, {pipeline_mode = #tpu.pipeline_mode<synchronous>, transform_indices = @transform_4, window_bounds = array<i64: 128, 128>}, {pipeline_mode = #tpu.pipeline_mode<synchronous>, transform_indices = @transform_5, window_bounds = array<i64: 1, 128>}, {pipeline_mode = #tpu.pipeline_mode<synchronous>, transform_indices = @transform_6, window_bounds = array<i64: 64, 128>}, {pipeline_mode = #tpu.pipeline_mode<synchronous>, transform_indices = @transform_7, window_bounds = array<i64: 1, 128>}, {pipeline_mode = #tpu.pipeline_mode<synchronous>, transform_indices = @transform_8, window_bounds = array<i64: 128, 128>}, {pipeline_mode = #tpu.pipeline_mode<synchronous>, transform_indices = @transform_9, window_bounds = array<i64: 1, 128>}, {transform_indices = @transform_10, window_bounds = array<i64: 16, 128>}, {transform_indices = @transform_11, window_bounds = array<i64: 16, 128>}]} {
    %c0 = arith.constant 0 : index
    %c0_0 = arith.constant 0 : index
    %0 = vector.load %arg1[%c0, %c0_0] : memref<16x128xbf16, #tpu.memory_space<vmem>>, vector<16x128xbf16>
    %c0_1 = arith.constant 0 : index
    %c0_2 = arith.constant 0 : index
    %1 = vector.load %arg3[%c0_1, %c0_2] : memref<128x128xbf16, #tpu.memory_space<vmem>>, vector<128x128xbf16>
    %cst = arith.constant dense<0.000000e+00> : vector<16x128xf32>
    %2 = tpu.matmul %0, %1, %cst {dimension_numbers = #tpu.dot_dimension_numbers<[1], [0], [0], [1], [0, 0, 1, 1], [], []>} : vector<16x128xbf16>, vector<128x128xbf16>, vector<16x128xf32> -> vector<16x128xf32>
    %c0_3 = arith.constant 0 : index
    %c0_4 = arith.constant 0 : index
    %3 = vector.load %arg4[%c0_3, %c0_4] : memref<1x128xf32, #tpu.memory_space<vmem>>, vector<1x128xf32>
    %4 = vector.broadcast %3 : vector<1x128xf32> to vector<16x128xf32>
    %5 = arith.addf %2, %4 : vector<16x128xf32>
    %cst_5 = arith.constant 0.000000e+00 : f32
    %6 = vector.broadcast %cst_5 : f32 to vector<16x128xf32>
    %7 = arith.maximumf %5, %6 : vector<16x128xf32>
    %8 = arith.truncf %7 : vector<16x128xf32> to vector<16x128xbf16>
    %c0_6 = arith.constant 0 : index
    %c0_7 = arith.constant 0 : index
    %9 = vector.load %arg5[%c0_6, %c0_7] : memref<128x128xbf16, #tpu.memory_space<vmem>>, vector<128x128xbf16>
    %cst_8 = arith.constant dense<0.000000e+00> : vector<16x128xf32>
    %10 = tpu.matmul %8, %9, %cst_8 {dimension_numbers = #tpu.dot_dimension_numbers<[1], [0], [0], [1], [0, 0, 1, 1], [], []>} : vector<16x128xbf16>, vector<128x128xbf16>, vector<16x128xf32> -> vector<16x128xf32>
    %c0_9 = arith.constant 0 : index
    %c0_10 = arith.constant 0 : index
    %11 = vector.load %arg6[%c0_9, %c0_10] : memref<1x128xf32, #tpu.memory_space<vmem>>, vector<1x128xf32>
    %12 = vector.broadcast %11 : vector<1x128xf32> to vector<16x128xf32>
    %13 = arith.addf %10, %12 : vector<16x128xf32>
    %14 = vector.extract_strided_slice %13 {offsets = [0, 0], sizes = [16, 64], strides = [1, 1]} : vector<16x128xf32> to vector<16x64xf32>
    %15 = vector.extract_strided_slice %13 {offsets = [0, 64], sizes = [16, 64], strides = [1, 1]} : vector<16x128xf32> to vector<16x64xf32>
    %cst_11 = arith.constant 5.000000e-01 : f32
    %16 = vector.broadcast %cst_11 : f32 to vector<16x64xf32>
    %17 = arith.mulf %16, %15 : vector<16x64xf32>
    %18 = math.exp %17 : vector<16x64xf32>
    %c0_12 = arith.constant 0 : index
    %c0_13 = arith.constant 0 : index
    %19 = vector.load %arg2[%c0_12, %c0_13] : memref<16x64xf32, #tpu.memory_space<vmem>>, vector<16x64xf32>
    %cst_14 = arith.constant 0.00999999977 : f32
    %20 = vector.broadcast %cst_14 : f32 to vector<16x64xf32>
    %21 = arith.mulf %20, %19 : vector<16x64xf32>
    %22 = arith.mulf %18, %21 : vector<16x64xf32>
    %23 = arith.addf %22, %14 : vector<16x64xf32>
    %24 = arith.truncf %23 : vector<16x64xf32> to vector<16x64xbf16>
    %c0_15 = arith.constant 0 : index
    %c0_16 = arith.constant 0 : index
    %25 = vector.load %arg7[%c0_15, %c0_16] : memref<64x128xbf16, #tpu.memory_space<vmem>>, vector<64x128xbf16>
    %cst_17 = arith.constant dense<0.000000e+00> : vector<16x128xf32>
    %26 = tpu.matmul %24, %25, %cst_17 {dimension_numbers = #tpu.dot_dimension_numbers<[1], [0], [0], [1], [0, 0, 1, 1], [], []>} : vector<16x64xbf16>, vector<64x128xbf16>, vector<16x128xf32> -> vector<16x128xf32>
    %c0_18 = arith.constant 0 : index
    %c0_19 = arith.constant 0 : index
    %27 = vector.load %arg8[%c0_18, %c0_19] : memref<1x128xf32, #tpu.memory_space<vmem>>, vector<1x128xf32>
    %28 = vector.broadcast %27 : vector<1x128xf32> to vector<16x128xf32>
    %29 = arith.addf %26, %28 : vector<16x128xf32>
    %cst_20 = arith.constant 0.000000e+00 : f32
    %30 = vector.broadcast %cst_20 : f32 to vector<16x128xf32>
    %31 = arith.maximumf %29, %30 : vector<16x128xf32>
    %32 = arith.truncf %31 : vector<16x128xf32> to vector<16x128xbf16>
    %c0_21 = arith.constant 0 : index
    %c0_22 = arith.constant 0 : index
    %33 = vector.load %arg9[%c0_21, %c0_22] : memref<128x128xbf16, #tpu.memory_space<vmem>>, vector<128x128xbf16>
    %cst_23 = arith.constant dense<0.000000e+00> : vector<16x128xf32>
    %34 = tpu.matmul %32, %33, %cst_23 {dimension_numbers = #tpu.dot_dimension_numbers<[1], [0], [0], [1], [0, 0, 1, 1], [], []>} : vector<16x128xbf16>, vector<128x128xbf16>, vector<16x128xf32> -> vector<16x128xf32>
    %c0_24 = arith.constant 0 : index
    %c0_25 = arith.constant 0 : index
    %35 = vector.load %arg10[%c0_24, %c0_25] : memref<1x128xf32, #tpu.memory_space<vmem>>, vector<1x128xf32>
    %36 = vector.broadcast %35 : vector<1x128xf32> to vector<16x128xf32>
    %37 = arith.addf %34, %36 : vector<16x128xf32>
    %38 = vector.shape_cast %37 : vector<16x128xf32> to vector<16x8x16xf32>
    %cst_26 = arith.constant dense<0xFF800000> : vector<16x8xf32>
    %39 = vector.multi_reduction <maximumf>, %38, %cst_26 [2] : vector<16x8x16xf32> to vector<16x8xf32>
    %40 = vector.shape_cast %39 : vector<16x8xf32> to vector<16x8x1xf32>
    %41 = vector.broadcast %40 : vector<16x8x1xf32> to vector<16x8x16xf32>
    %42 = arith.subf %38, %41 : vector<16x8x16xf32>
    %43 = math.exp %42 : vector<16x8x16xf32>
    %cst_27 = arith.constant dense<0.000000e+00> : vector<16x8xf32>
    %44 = vector.multi_reduction <add>, %43, %cst_27 [2] : vector<16x8x16xf32> to vector<16x8xf32>
    %45 = vector.shape_cast %44 : vector<16x8xf32> to vector<16x8x1xf32>
    %46 = vector.broadcast %45 : vector<16x8x1xf32> to vector<16x8x16xf32>
    %47 = arith.divf %43, %46 : vector<16x8x16xf32>
    %48 = vector.shape_cast %47 : vector<16x8x16xf32> to vector<16x128xf32>
    %c0_28 = arith.constant 0 : index
    %c0_29 = arith.constant 0 : index
    %49 = vector.load %arg11[%c0_28, %c0_29] : memref<16x128xf32, #tpu.memory_space<vmem>>, vector<16x128xf32>
    tpu.vector_store %arg11[%c0_28, %c0_29], %48 {strides = array<i32>} : memref<16x128xf32, #tpu.memory_space<vmem>>, vector<16x128xf32>,
    %c0_30 = arith.constant 0 : index
    %c0_31 = arith.constant 0 : index
    %50 = vector.load %arg12[%c0_30, %c0_31] : memref<16x128xf32, #tpu.memory_space<vmem>>, vector<16x128xf32>
    tpu.vector_store %arg12[%c0_30, %c0_31], %13 {strides = array<i32>} : memref<16x128xf32, #tpu.memory_space<vmem>>, vector<16x128xf32>,
    return
  }
  func.func @transform_0(%arg0: i32) -> (i32, i32) {
    %c0_i32 = arith.constant 0 : i32
    %c0_i32_0 = arith.constant 0 : i32
    return %arg0, %c0_i32 : i32, i32
  }
  func.func @transform_1(%arg0: i32) -> (i32, i32) {
    %c0_i32 = arith.constant 0 : i32
    %c0_i32_0 = arith.constant 0 : i32
    return %arg0, %c0_i32 : i32, i32
  }
  func.func @transform_2(%arg0: i32) -> (i32, i32) {
    %c0_i32 = arith.constant 0 : i32
    %c0_i32_0 = arith.constant 0 : i32
    %c0_i32_1 = arith.constant 0 : i32
    return %c0_i32, %c0_i32_0 : i32, i32
  }
  func.func @transform_3(%arg0: i32) -> (i32, i32) {
    %c0_i32 = arith.constant 0 : i32
    %c0_i32_0 = arith.constant 0 : i32
    %c0_i32_1 = arith.constant 0 : i32
    return %c0_i32, %c0_i32_0 : i32, i32
  }
  func.func @transform_4(%arg0: i32) -> (i32, i32) {
    %c0_i32 = arith.constant 0 : i32
    %c0_i32_0 = arith.constant 0 : i32
    %c0_i32_1 = arith.constant 0 : i32
    return %c0_i32, %c0_i32_0 : i32, i32
  }
  func.func @transform_5(%arg0: i32) -> (i32, i32) {
    %c0_i32 = arith.constant 0 : i32
    %c0_i32_0 = arith.constant 0 : i32
    %c0_i32_1 = arith.constant 0 : i32
    return %c0_i32, %c0_i32_0 : i32, i32
  }
  func.func @transform_6(%arg0: i32) -> (i32, i32) {
    %c0_i32 = arith.constant 0 : i32
    %c0_i32_0 = arith.constant 0 : i32
    %c0_i32_1 = arith.constant 0 : i32
    return %c0_i32, %c0_i32_0 : i32, i32
  }
  func.func @transform_7(%arg0: i32) -> (i32, i32) {
    %c0_i32 = arith.constant 0 : i32
    %c0_i32_0 = arith.constant 0 : i32
    %c0_i32_1 = arith.constant 0 : i32
    return %c0_i32, %c0_i32_0 : i32, i32
  }
  func.func @transform_8(%arg0: i32) -> (i32, i32) {
    %c0_i32 = arith.constant 0 : i32
    %c0_i32_0 = arith.constant 0 : i32
    %c0_i32_1 = arith.constant 0 : i32
    return %c0_i32, %c0_i32_0 : i32, i32
  }
  func.func @transform_9(%arg0: i32) -> (i32, i32) {
    %c0_i32 = arith.constant 0 : i32
    %c0_i32_0 = arith.constant 0 : i32
    %c0_i32_1 = arith.constant 0 : i32
    return %c0_i32, %c0_i32_0 : i32, i32
  }
  func.func @transform_10(%arg0: i32) -> (i32, i32) {
    %c0_i32 = arith.constant 0 : i32
    %c0_i32_0 = arith.constant 0 : i32
    return %arg0, %c0_i32 : i32, i32
  }
  func.func @transform_11(%arg0: i32) -> (i32, i32) {
    %c0_i32 = arith.constant 0 : i32
    %c0_i32_0 = arith.constant 0 : i32
    return %arg0, %c0_i32 : i32, i32
  }
}

</mosaic_0001>

<llo_original>
// kernel: molecule_vae_forward.1
$region0: #{molecule_vae_forward.1}
  #allocation0 [shape = 'u32[]', space=smem, size = 0x4, offset = 0x4, fixed_abs, tag = 'smem constant byte address 0x4 - core index']
  #allocation1 [shape = 'u32[72,128]{1,0:T(1,128)}', space=vmem, size = 0x9000, scoped, tag = 'internal scratch']
  %s0 = inlined_call_operand.vmem [shape: bf16[16,128], index: 0, kind: input, shape index: {}]
  %s1 = inlined_call_operand.vmem [shape: f32[16,64], index: 1, kind: input, shape index: {}]
  %s2 = inlined_call_operand.vmem [shape: bf16[128,128], index: 2, kind: input, shape index: {}]
  %s3 = inlined_call_operand.vmem [shape: f32[1,128], index: 3, kind: input, shape index: {}]
  %s4 = inlined_call_operand.hbm [shape: bf16[128,128], index: 4, kind: input, shape index: {}]
  %s5 = inlined_call_operand.vmem [shape: f32[1,128], index: 5, kind: input, shape index: {}]
  %s6 = inlined_call_operand.hbm [shape: bf16[64,128], index: 6, kind: input, shape index: {}]
  %s7 = inlined_call_operand.vmem [shape: f32[1,128], index: 7, kind: input, shape index: {}]
  %s8 = inlined_call_operand.hbm [shape: bf16[128,128], index: 8, kind: input, shape index: {}]
  %s9 = inlined_call_operand.hbm [shape: f32[1,128], index: 9, kind: input, shape index: {}]
  %s10 = inlined_call_operand.vmem [shape: f32[16,128], index: 10, kind: output, shape index: {0}]
  %s11 = inlined_call_operand.vmem [shape: f32[16,128], index: 11, kind: output, shape index: {1}]
  %12 = xla_tuple %s10, %s11
  %s13 = sld [smem:[#allocation0]]
  $region74: #{molecule_vae_forward.1} parent=0
    _
  %s15 = ssub.s32 1, %s13
  %s16 = scalar_select 0, %s15, %s13
  $region1: #{molecule_vae_forward.1} parent=0
    #allocation2 [shape = 'u8[32768]{0}', space=vmem, size = 0x8000, scoped, tag = 'input window, operand 4, single buffered']
    #allocation3 [shape = 's32[1]{0}', space=sflag, size = 0x4, scoped, tag = 'scoped memory for molecule_vae_forward.1']
    #allocation4 [shape = 'u8[16384]{0}', space=vmem, size = 0x4000, scoped, tag = 'input window, operand 6, single buffered']
    #allocation5 [shape = 's32[1]{0}', space=sflag, size = 0x4, scoped, tag = 'scoped memory for molecule_vae_forward.1']
    #allocation6 [shape = 'u8[32768]{0}', space=vmem, size = 0x8000, scoped, tag = 'input window, operand 8, single buffered']
    #allocation7 [shape = 'u8[512]{0}', space=vmem, size = 0x400, scoped, tag = 'input window, operand 9, single buffered']
    #allocation8 [shape = 's32[1]{0}', space=sflag, size = 0x4, scoped, tag = 'scoped memory for molecule_vae_forward.1']
    %17 = vsyncpa [#allocation3], 0
    %18 = vsyncpa [#allocation5], 0
    %19 = vsyncpa [#allocation8], 0
    // Predicated region
    $region2: #{molecule_vae_forward.1} parent=1 // pred_check
      _
    $region3: #{molecule_vae_forward.1} parent=1 // pred_check_branch
      %21 = sbr.rel (0) target = $region5
    $region4: #{molecule_vae_forward.1} parent=1 // pred_region
      _
    $region5: #{molecule_vae_forward.1} parent=1 // pred_fallthru
      _
    // Predicated region
    $region6: #{molecule_vae_forward.1} parent=1 // pred_check
      _
    $region7: #{molecule_vae_forward.1} parent=1 // pred_check_branch
      %23 = sbr.rel (0) target = $region9
    $region8: #{molecule_vae_forward.1} parent=1 // pred_region
      _
    $region9: #{molecule_vae_forward.1} parent=1 // pred_fallthru
      _
    // Predicated region
    $region10: #{molecule_vae_forward.1} parent=1 // pred_check
      _
    $region11: #{molecule_vae_forward.1} parent=1 // pred_check_branch
      %25 = sbr.rel (0) target = $region13
    $region12: #{molecule_vae_forward.1} parent=1 // pred_region
      _
    $region13: #{molecule_vae_forward.1} parent=1 // pred_fallthru
      _
    // Predicated region
    $region14: #{molecule_vae_forward.1} parent=1 // pred_check
      _
    $region15: #{molecule_vae_forward.1} parent=1 // pred_check_branch
      %27 = sbr.rel (0) target = $region17
    $region16: #{molecule_vae_forward.1} parent=1 // pred_region
      _
    $region17: #{molecule_vae_forward.1} parent=1 // pred_fallthru
      _
    // Predicated region
    $region18: #{molecule_vae_forward.1} parent=1 // pred_check
      _
    $region19: #{molecule_vae_forward.1} parent=1 // pred_check_branch
      %29 = sbr.rel (0) target = $region21
    $region20: #{molecule_vae_forward.1} parent=1 // pred_region
      %31 = vsyncadd [#allocation3], 0
      %s32 = sshll.u32 %s4, 4
      %s33 = int_to_ptr.hbm [resolvable:$true] %s32
      %s34 = sshll.u32 [#allocation2], 4
      %s35 = int_to_ptr.vmem [resolvable:$true] %s34
      %40 = dma.hbm_to_vmem [thread:$0]  %s33, 1024, %s35, [#allocation3], 64, 64, 4
    $region21: #{molecule_vae_forward.1} parent=1 // pred_fallthru
      _
    // Predicated region
    $region22: #{molecule_vae_forward.1} parent=1 // pred_check
      _
    $region23: #{molecule_vae_forward.1} parent=1 // pred_check_branch
      %42 = sbr.rel (0) target = $region25
    $region24: #{molecule_vae_forward.1} parent=1 // pred_region
      _
    $region25: #{molecule_vae_forward.1} parent=1 // pred_fallthru
      _
    // Predicated region
    $region26: #{molecule_vae_forward.1} parent=1 // pred_check
      _
    $region27: #{molecule_vae_forward.1} parent=1 // pred_check_branch
      %44 = sbr.rel (0) target = $region29
    $region28: #{molecule_vae_forward.1} parent=1 // pred_region
      %46 = vsyncadd [#allocation5], 0
      %s47 = sshll.u32 %s6, 4
      %s48 = int_to_ptr.hbm [resolvable:$true] %s47
      %s49 = sshll.u32 [#allocation4], 4
      %s50 = int_to_ptr.vmem [resolvable:$true] %s49
      %55 = dma.hbm_to_vmem [thread:$0]  %s48, 512, %s50, [#allocation5], 64, 64, 4
    $region29: #{molecule_vae_forward.1} parent=1 // pred_fallthru
      _
    // Predicated region
    $region30: #{molecule_vae_forward.1} parent=1 // pred_check
      _
    $region31: #{molecule_vae_forward.1} parent=1 // pred_check_branch
      %57 = sbr.rel (0) target = $region33
    $region32: #{molecule_vae_forward.1} parent=1 // pred_region
      _
    $region33: #{molecule_vae_forward.1} parent=1 // pred_fallthru
      _
    // Predicated region
    $region34: #{molecule_vae_forward.1} parent=1 // pred_check
      _
    $region35: #{molecule_vae_forward.1} parent=1 // pred_check_branch
      %59 = sbr.rel (0) target = $region37
    $region36: #{molecule_vae_forward.1} parent=1 // pred_region
      %61 = vsyncadd [#allocation5], 0
      %s62 = sshll.u32 %s8, 4
      %s63 = int_to_ptr.hbm [resolvable:$true] %s62
      %s64 = sshll.u32 [#allocation6], 4
      %s65 = int_to_ptr.vmem [resolvable:$true] %s64
      %70 = dma.hbm_to_vmem [thread:$0]  %s63, 1024, %s65, [#allocation5], 64, 64, 4
    $region37: #{molecule_vae_forward.1} parent=1 // pred_fallthru
      _
    // Predicated region
    $region38: #{molecule_vae_forward.1} parent=1 // pred_check
      _
    $region39: #{molecule_vae_forward.1} parent=1 // pred_check_branch
      %72 = sbr.rel (0) target = $region41
    $region40: #{molecule_vae_forward.1} parent=1 // pred_region
      %74 = vsyncadd [#allocation8], 0
      %s76 = sshll.u32 %s9, 4
      %s77 = int_to_ptr.hbm [resolvable:$true] %s76
      %s78 = sshll.u32 [#allocation7], 4
      %s79 = int_to_ptr.vmem [resolvable:$true] %s78
      %81 = dma.hbm_to_vmem [thread:$0]  %s77, 16, %s79, [#allocation8]
    $region41: #{molecule_vae_forward.1} parent=1 // pred_fallthru
      _
    // Predicated region
    $region42: #{molecule_vae_forward.1} parent=1 // pred_check
      _
    $region43: #{molecule_vae_forward.1} parent=1 // pred_check_branch
      %83 = sbr.rel (0) target = $region45
    $region44: #{molecule_vae_forward.1} parent=1 // pred_region
      %85 = dma.done [#allocation3], 1024
    $region45: #{molecule_vae_forward.1} parent=1 // pred_fallthru
      _
    // Predicated region
    $region46: #{molecule_vae_forward.1} parent=1 // pred_check
      _
    $region47: #{molecule_vae_forward.1} parent=1 // pred_check_branch
      %87 = sbr.rel (0) target = $region49
    $region48: #{molecule_vae_forward.1} parent=1 // pred_region
      %89 = dma.done [#allocation5], 512
    $region49: #{molecule_vae_forward.1} parent=1 // pred_fallthru
      _
    // Predicated region
    $region50: #{molecule_vae_forward.1} parent=1 // pred_check
      _
    $region51: #{molecule_vae_forward.1} parent=1 // pred_check_branch
      %91 = sbr.rel (0) target = $region53
    $region52: #{molecule_vae_forward.1} parent=1 // pred_region
      %93 = dma.done [#allocation5], 1024
    $region53: #{molecule_vae_forward.1} parent=1 // pred_fallthru
      _
    // Predicated region
    $region54: #{molecule_vae_forward.1} parent=1 // pred_check
      _
    $region55: #{molecule_vae_forward.1} parent=1 // pred_check_branch
      %95 = sbr.rel (0) target = $region57
    $region56: #{molecule_vae_forward.1} parent=1 // pred_region
      %97 = dma.done [#allocation8], 16
    $region57: #{molecule_vae_forward.1} parent=1 // pred_fallthru
      _
    %v99 = vld [vmem:[%s0] sm:$0xf]
    %v100 = vld [vmem:[%s0 + $0x4] sm:$0xf]
    %v101 = vld [vmem:[%s2] sm:$0xf]
    %v102 = vld [vmem:[%s2 + $0x4] sm:$0xf]
    %v103 = vld [vmem:[%s2 + $0x8] sm:$0xf]
    %v104 = vld [vmem:[%s2 + $0xc] sm:$0xf]
    %v105 = vld [vmem:[%s2 + $0x10] sm:$0xf]
    %v106 = vld [vmem:[%s2 + $0x14] sm:$0xf]
    %v107 = vld [vmem:[%s2 + $0x18] sm:$0xf]
    %v108 = vld [vmem:[%s2 + $0x1c] sm:$0xf]
    %v109 = vld [vmem:[%s2 + $0x20] sm:$0xf]
    %v110 = vld [vmem:[%s2 + $0x24] sm:$0xf]
    %v111 = vld [vmem:[%s2 + $0x28] sm:$0xf]
    %v112 = vld [vmem:[%s2 + $0x2c] sm:$0xf]
    %v113 = vld [vmem:[%s2 + $0x30] sm:$0xf]
    %v114 = vld [vmem:[%s2 + $0x34] sm:$0xf]
    %v115 = vld [vmem:[%s2 + $0x38] sm:$0xf]
    %v116 = vld [vmem:[%s2 + $0x3c] sm:$0xf]
    %v117 = vld [vmem:[%s3] sm:$0x1]
    %v119 = vperm.slane %v117, 0
    %v123 = vunpack.c.l.b16 %v99
    %v124 = vunpack.c.l.b16 %v100
    %v125 = vpack.c.b16 %v124, %v123
    %v143 = vunpack.c.l.b16 %v101
    %v144 = vunpack.c.l.b16 %v102
    %v145 = vunpack.c.l.b16 %v103
    %v146 = vunpack.c.l.b16 %v104
    %v147 = vunpack.c.l.b16 %v105
    %v148 = vunpack.c.l.b16 %v106
    %v149 = vunpack.c.l.b16 %v107
    %v150 = vunpack.c.l.b16 %v108
    %v151 = vunpack.c.l.b16 %v109
    %v152 = vunpack.c.l.b16 %v110
    %v153 = vunpack.c.l.b16 %v111
    %v154 = vunpack.c.l.b16 %v112
    %v155 = vunpack.c.l.b16 %v113
    %v156 = vunpack.c.l.b16 %v114
    %v157 = vunpack.c.l.b16 %v115
    %v158 = vunpack.c.l.b16 %v116
    %v159 = vpack.c.b16 %v144, %v143
    %v160 = vpack.c.b16 %v146, %v145
    %v161 = vpack.c.b16 %v148, %v147
    %v162 = vpack.c.b16 %v150, %v149
    %v163 = vpack.c.b16 %v152, %v151
    %v164 = vpack.c.b16 %v154, %v153
    %v165 = vpack.c.b16 %v156, %v155
    %v166 = vpack.c.b16 %v158, %v157
    %175 = vmatpush.bf16.msra.mxu0 %v166
    %176 = vmatpush.bf16.msra.mxu0 %v165
    %177 = vmatpush.bf16.msra.mxu0 %v164
    %178 = vmatpush.bf16.msra.mxu0 %v163
    %179 = vmatpush.bf16.msra.mxu0 %v162
    %180 = vmatpush.bf16.msra.mxu0 %v161
    %181 = vmatpush.bf16.msra.mxu0 %v160
    %182 = vmatpush.bf16.msra.mxu0 %v159
    %183 = vmatmul.bf16.gmra.mxu0 %v125
    %v184 = vpop.f32.mrf.mxu0
    %v185 = vadd.f32 %v119, %v184
    %v186 = vpop.f32.mrf.mxu0
    %v187 = vadd.f32 %v119, %v186
    %188 = vdwg.mxu0
    %v189 = vmax.f32 %v185, 0.0
    %v190 = vmax.f32 %v187, 0.0
    %v191 = vpack.c.bf16 %v190, %v189
    %v192 = vld [vmem:[#allocation2] sm:$0xf]
    %v193 = vld [vmem:[#allocation2 + $0x4] sm:$0xf]
    %v194 = vld [vmem:[#allocation2 + $0x8] sm:$0xf]
    %v195 = vld [vmem:[#allocation2 + $0xc] sm:$0xf]
    %v196 = vld [vmem:[#allocation2 + $0x10] sm:$0xf]
    %v197 = vld [vmem:[#allocation2 + $0x14] sm:$0xf]
    %v198 = vld [vmem:[#allocation2 + $0x18] sm:$0xf]
    %v199 = vld [vmem:[#allocation2 + $0x1c] sm:$0xf]
    %v200 = vld [vmem:[#allocation2 + $0x20] sm:$0xf]
    %v201 = vld [vmem:[#allocation2 + $0x24] sm:$0xf]
    %v202 = vld [vmem:[#allocation2 + $0x28] sm:$0xf]
    %v203 = vld [vmem:[#allocation2 + $0x2c] sm:$0xf]
    %v204 = vld [vmem:[#allocation2 + $0x30] sm:$0xf]
    %v205 = vld [vmem:[#allocation2 + $0x34] sm:$0xf]
    %v206 = vld [vmem:[#allocation2 + $0x38] sm:$0xf]
    %v207 = vld [vmem:[#allocation2 + $0x3c] sm:$0xf]
    %v208 = vld [vmem:[%s5] sm:$0x1]
    %v210 = vperm.slane %v208, 0
    %v228 = vunpack.c.l.b16 %v192
    %v229 = vunpack.c.l.b16 %v193
    %v230 = vunpack.c.l.b16 %v194
    %v231 = vunpack.c.l.b16 %v195
    %v232 = vunpack.c.l.b16 %v196
    %v233 = vunpack.c.l.b16 %v197
    %v234 = vunpack.c.l.b16 %v198
    %v235 = vunpack.c.l.b16 %v199
    %v236 = vunpack.c.l.b16 %v200
    %v237 = vunpack.c.l.b16 %v201
    %v238 = vunpack.c.l.b16 %v202
    %v239 = vunpack.c.l.b16 %v203
    %v240 = vunpack.c.l.b16 %v204
    %v241 = vunpack.c.l.b16 %v205
    %v242 = vunpack.c.l.b16 %v206
    %v243 = vunpack.c.l.b16 %v207
    %v244 = vpack.c.b16 %v229, %v228
    %v245 = vpack.c.b16 %v231, %v230
    %v246 = vpack.c.b16 %v233, %v232
    %v247 = vpack.c.b16 %v235, %v234
    %v248 = vpack.c.b16 %v237, %v236
    %v249 = vpack.c.b16 %v239, %v238
    %v250 = vpack.c.b16 %v241, %v240
    %v251 = vpack.c.b16 %v243, %v242
    %260 = vmatpush.bf16.msra.mxu0 %v251
    %261 = vmatpush.bf16.msra.mxu0 %v250
    %262 = vmatpush.bf16.msra.mxu0 %v249
    %263 = vmatpush.bf16.msra.mxu0 %v248
    %264 = vmatpush.bf16.msra.mxu0 %v247
    %265 = vmatpush.bf16.msra.mxu0 %v246
    %266 = vmatpush.bf16.msra.mxu0 %v245
    %267 = vmatpush.bf16.msra.mxu0 %v244
    %268 = vmatmul.bf16.gmra.mxu0 %v191
    %v269 = vpop.f32.mrf.mxu0
    %v270 = vadd.f32 %v210, %v269
    %v271 = vpop.f32.mrf.mxu0
    %v272 = vadd.f32 %v210, %v271
    %273 = vdwg.mxu0
    %v274 = vmul.f32 %v270, 0.5
    %v275 = vmul.f32 %v272, 0.5
    %v276 = vmul.f32 %v274, 1.442695
    %v277 = vpow.pop %v276
    %v278 = vmul.f32 %v275, 1.442695
    %v279 = vpow.pop %v278
    %v280 = vld [vmem:[%s1] sm:$0xff]
    %v281 = vld [vmem:[%s1 + $0x8] sm:$0xff]
    %v282 = vmul.f32 %v280, 0.01
    %v283 = vmul.f32 %v281, 0.01
    %286 = vrot.lane.b32.xlu0 %v282, 64
    %v287 = vpop.permute.xlu0 %286
    %288 = vrot.lane.b32.xlu0 %v283, 64
    %v289 = vpop.permute.xlu0 %288
    %v292 = vmul.f32 %v277, %v287
    %v293 = vmul.f32 %v279, %v289
    %296 = vrot.lane.b32.xlu0 %v270, 64
    %v297 = vpop.permute.xlu0 %296
    %298 = vrot.lane.b32.xlu0 %v272, 64
    %v299 = vpop.permute.xlu0 %298
    %v302 = vadd.f32 %v292, %v297
    %v303 = vadd.f32 %v293, %v299
    %v304 = vpack.c.bf16 %v303, %v302
    %v305 = vld [vmem:[#allocation4] sm:$0xf]
    %v306 = vld [vmem:[#allocation4 + $0x4] sm:$0xf]
    %v307 = vld [vmem:[#allocation4 + $0x8] sm:$0xf]
    %v308 = vld [vmem:[#allocation4 + $0xc] sm:$0xf]
    %v309 = vld [vmem:[#allocation4 + $0x10] sm:$0xf]
    %v310 = vld [vmem:[#allocation4 + $0x14] sm:$0xf]
    %v311 = vld [vmem:[#allocation4 + $0x18] sm:$0xf]
    %v312 = vld [vmem:[#allocation4 + $0x1c] sm:$0xf]
    %v313 = vld [vmem:[%s7] sm:$0x1]
    %v315 = vperm.slane %v313, 0
    %318 = vrot.lane.b32.xlu0 %v304, 64
    %v319 = vpop.permute.xlu0 %318
    %v328 = vunpack.c.l.b16 %v305
    %v329 = vunpack.c.l.b16 %v306
    %v330 = vunpack.c.l.b16 %v307
    %v331 = vunpack.c.l.b16 %v308
    %v332 = vunpack.c.l.b16 %v309
    %v333 = vunpack.c.l.b16 %v310
    %v334 = vunpack.c.l.b16 %v311
    %v335 = vunpack.c.l.b16 %v312
    %v336 = vpack.c.b16 %v329, %v328
    %v337 = vpack.c.b16 %v331, %v330
    %v338 = vpack.c.b16 %v333, %v332
    %v339 = vpack.c.b16 %v335, %v334
    %vm344 = vcmask 523264
    %v346 = vsel %vm344, %v319, 0
    %348 = vmatpush.bf16.msra.mxu0 0
    %349 = vmatpush.bf16.msra.mxu0 0
    %350 = vmatpush.bf16.msra.mxu0 0
    %351 = vmatpush.bf16.msra.mxu0 0
    %352 = vmatpush.bf16.msra.mxu0 %v339
    %353 = vmatpush.bf16.msra.mxu0 %v338
    %354 = vmatpush.bf16.msra.mxu0 %v337
    %355 = vmatpush.bf16.msra.mxu0 %v336
    %356 = vmatmul.bf16.gmra.mxu0 %v346
    %v357 = vpop.f32.mrf.mxu0
    %v358 = vadd.f32 %v315, %v357
    %v359 = vpop.f32.mrf.mxu0
    %v360 = vadd.f32 %v315, %v359
    %361 = vdwg.mxu0
    %v362 = vmax.f32 %v358, 0.0
    %v363 = vmax.f32 %v360, 0.0
    %v364 = vpack.c.bf16 %v363, %v362
    %v365 = vld [vmem:[#allocation6] sm:$0xf]
    %v366 = vld [vmem:[#allocation6 + $0x4] sm:$0xf]
    %v367 = vld [vmem:[#allocation6 + $0x8] sm:$0xf]
    %v368 = vld [vmem:[#allocation6 + $0xc] sm:$0xf]
    %v369 = vld [vmem:[#allocation6 + $0x10] sm:$0xf]
    %v370 = vld [vmem:[#allocation6 + $0x14] sm:$0xf]
    %v371 = vld [vmem:[#allocation6 + $0x18] sm:$0xf]
    %v372 = vld [vmem:[#allocation6 + $0x1c] sm:$0xf]
    %v373 = vld [vmem:[#allocation6 + $0x20] sm:$0xf]
    %v374 = vld [vmem:[#allocation6 + $0x24] sm:$0xf]
    %v375 = vld [vmem:[#allocation6 + $0x28] sm:$0xf]
    %v376 = vld [vmem:[#allocation6 + $0x2c] sm:$0xf]
    %v377 = vld [vmem:[#allocation6 + $0x30] sm:$0xf]
    %v378 = vld [vmem:[#allocation6 + $0x34] sm:$0xf]
    %v379 = vld [vmem:[#allocation6 + $0x38] sm:$0xf]
    %v380 = vld [vmem:[#allocation6 + $0x3c] sm:$0xf]
    %v381 = vld [vmem:[#allocation7] sm:$0x1]
    %v383 = vperm.slane %v381, 0
    %v401 = vunpack.c.l.b16 %v365
    %v402 = vunpack.c.l.b16 %v366
    %v403 = vunpack.c.l.b16 %v367
    %v404 = vunpack.c.l.b16 %v368
    %v405 = vunpack.c.l.b16 %v369
    %v406 = vunpack.c.l.b16 %v370
    %v407 = vunpack.c.l.b16 %v371
    %v408 = vunpack.c.l.b16 %v372
    %v409 = vunpack.c.l.b16 %v373
    %v410 = vunpack.c.l.b16 %v374
    %v411 = vunpack.c.l.b16 %v375
    %v412 = vunpack.c.l.b16 %v376
    %v413 = vunpack.c.l.b16 %v377
    %v414 = vunpack.c.l.b16 %v378
    %v415 = vunpack.c.l.b16 %v379
    %v416 = vunpack.c.l.b16 %v380
    %v417 = vpack.c.b16 %v402, %v401
    %v418 = vpack.c.b16 %v404, %v403
    %v419 = vpack.c.b16 %v406, %v405
    %v420 = vpack.c.b16 %v408, %v407
    %v421 = vpack.c.b16 %v410, %v409
    %v422 = vpack.c.b16 %v412, %v411
    %v423 = vpack.c.b16 %v414, %v413
    %v424 = vpack.c.b16 %v416, %v415
    %433 = vmatpush.bf16.msra.mxu0 %v424
    %434 = vmatpush.bf16.msra.mxu0 %v423
    %435 = vmatpush.bf16.msra.mxu0 %v422
    %436 = vmatpush.bf16.msra.mxu0 %v421
    %437 = vmatpush.bf16.msra.mxu0 %v420
    %438 = vmatpush.bf16.msra.mxu0 %v419
    %439 = vmatpush.bf16.msra.mxu0 %v418
    %440 = vmatpush.bf16.msra.mxu0 %v417
    %441 = vmatmul.bf16.gmra.mxu0 %v364
    %v442 = vpop.f32.mrf.mxu0
    %v443 = vadd.f32 %v383, %v442
    %v444 = vpop.f32.mrf.mxu0
    %v445 = vadd.f32 %v383, %v444
    %446 = vdwg.mxu0
    %449 = vrot.lane.b32.xlu0 %v443, 112
    %v450 = vpop.permute.xlu0 %449
    %451 = vrot.lane.b32.xlu0 %v445, 112
    %v452 = vpop.permute.xlu0 %451
    %455 = vrot.lane.b32.xlu0 %v443, 96
    %v456 = vpop.permute.xlu0 %455
    %457 = vrot.lane.b32.xlu0 %v445, 96
    %v458 = vpop.permute.xlu0 %457
    %461 = vrot.lane.b32.xlu0 %v443, 80
    %v462 = vpop.permute.xlu0 %461
    %463 = vrot.lane.b32.xlu0 %v445, 80
    %v464 = vpop.permute.xlu0 %463
    %467 = vrot.lane.b32.xlu0 %v443, 64
    %v468 = vpop.permute.xlu0 %467
    %469 = vrot.lane.b32.xlu0 %v445, 64
    %v470 = vpop.permute.xlu0 %469
    %473 = vrot.lane.b32.xlu0 %v443, 48
    %v474 = vpop.permute.xlu0 %473
    %475 = vrot.lane.b32.xlu0 %v445, 48
    %v476 = vpop.permute.xlu0 %475
    %479 = vrot.lane.b32.xlu0 %v443, 32
    %v480 = vpop.permute.xlu0 %479
    %481 = vrot.lane.b32.xlu0 %v445, 32
    %v482 = vpop.permute.xlu0 %481
    %485 = vrot.lane.b32.xlu0 %v443, 16
    %v486 = vpop.permute.xlu0 %485
    %487 = vrot.lane.b32.xlu0 %v445, 16
    %v488 = vpop.permute.xlu0 %487
    %v491 = vrot.slane %v456, 4
    %vm492 = vcmask 1047556
    %v493 = vsel %vm492, %v491, %v443
    %v494 = vrot.slane %v443, 4
    %v495 = vsel %vm492, %v456, %v494
    %v497 = vunpack.c.l.s4 1983009808
    %v498 = vunpack.c.0.s8 %v497
    %v499 = vperm.slane %v493, %v498
    %v501 = vunpack.c.l.s4 1983009808
    %v502 = vunpack.c.0.s8 %v501
    %v503 = vperm.slane %v495, %v502
    %v504 = vrot.slane %v462, 4
    %v505 = vsel %vm492, %v504, %v450
    %v506 = vrot.slane %v450, 4
    %v507 = vsel %vm492, %v462, %v506
    %v509 = vunpack.c.l.s4 1983009808
    %v510 = vunpack.c.0.s8 %v509
    %v511 = vperm.slane %v505, %v510
    %v513 = vunpack.c.l.s4 1983009808
    %v514 = vunpack.c.0.s8 %v513
    %v515 = vperm.slane %v507, %v514
    %v516 = vrot.slane %v480, 4
    %v517 = vsel %vm492, %v516, %v468
    %v518 = vrot.slane %v468, 4
    %v519 = vsel %vm492, %v480, %v518
    %v521 = vunpack.c.l.s4 1983009808
    %v522 = vunpack.c.0.s8 %v521
    %v523 = vperm.slane %v517, %v522
    %v525 = vunpack.c.l.s4 1983009808
    %v526 = vunpack.c.0.s8 %v525
    %v527 = vperm.slane %v519, %v526
    %v528 = vrot.slane %v486, 4
    %v529 = vsel %vm492, %v528, %v474
    %v530 = vrot.slane %v474, 4
    %v531 = vsel %vm492, %v486, %v530
    %v533 = vunpack.c.l.s4 1983009808
    %v534 = vunpack.c.0.s8 %v533
    %v535 = vperm.slane %v529, %v534
    %v537 = vunpack.c.l.s4 1983009808
    %v538 = vunpack.c.0.s8 %v537
    %v539 = vperm.slane %v531, %v538
    %v540 = vrot.slane %v511, 4
    %v541 = vsel %vm492, %v540, %v499
    %v542 = vrot.slane %v499, 4
    %v543 = vsel %vm492, %v511, %v542
    %v545 = vunpack.c.l.s4 1934713408
    %v546 = vunpack.c.0.s8 %v545
    %v547 = vperm.slane %v541, %v546
    %v549 = vunpack.c.l.s4 1934713408
    %v550 = vunpack.c.0.s8 %v549
    %v551 = vperm.slane %v543, %v550
    %v552 = vrot.slane %v515, 4
    %v553 = vsel %vm492, %v552, %v503
    %v554 = vrot.slane %v503, 4
    %v555 = vsel %vm492, %v515, %v554
    %v557 = vunpack.c.l.s4 1934713408
    %v558 = vunpack.c.0.s8 %v557
    %v559 = vperm.slane %v553, %v558
    %v561 = vunpack.c.l.s4 1934713408
    %v562 = vunpack.c.0.s8 %v561
    %v563 = vperm.slane %v555, %v562
    %v564 = vrot.slane %v535, 4
    %v565 = vsel %vm492, %v564, %v523
    %v566 = vrot.slane %v523, 4
    %v567 = vsel %vm492, %v535, %v566
    %v569 = vunpack.c.l.s4 1934713408
    %v570 = vunpack.c.0.s8 %v569
    %v571 = vperm.slane %v565, %v570
    %v573 = vunpack.c.l.s4 1934713408
    %v574 = vunpack.c.0.s8 %v573
    %v575 = vperm.slane %v567, %v574
    %v576 = vrot.slane %v539, 4
    %v577 = vsel %vm492, %v576, %v527
    %v578 = vrot.slane %v527, 4
    %v579 = vsel %vm492, %v539, %v578
    %v581 = vunpack.c.l.s4 1934713408
    %v582 = vunpack.c.0.s8 %v581
    %v583 = vperm.slane %v577, %v582
    %v585 = vunpack.c.l.s4 1934713408
    %v586 = vunpack.c.0.s8 %v585
    %v587 = vperm.slane %v579, %v586
    %v588 = vrot.slane %v571, 4
    %v589 = vsel %vm492, %v588, %v547
    %v590 = vrot.slane %v547, 4
    %v591 = vsel %vm492, %v571, %v590
    %v592 = vrot.slane %v575, 4
    %v593 = vsel %vm492, %v592, %v551
    %v594 = vrot.slane %v551, 4
    %v595 = vsel %vm492, %v575, %v594
    %v596 = vrot.slane %v583, 4
    %v597 = vsel %vm492, %v596, %v559
    %v598 = vrot.slane %v559, 4
    %v599 = vsel %vm492, %v583, %v598
    %v600 = vrot.slane %v587, 4
    %v601 = vsel %vm492, %v600, %v563
    %v602 = vrot.slane %v563, 4
    %v603 = vsel %vm492, %v587, %v602
    %v604 = vrot.slane %v458, 4
    %v605 = vsel %vm492, %v604, %v445
    %v606 = vrot.slane %v445, 4
    %v607 = vsel %vm492, %v458, %v606
    %v609 = vunpack.c.l.s4 1983009808
    %v610 = vunpack.c.0.s8 %v609
    %v611 = vperm.slane %v605, %v610
    %v613 = vunpack.c.l.s4 1983009808
    %v614 = vunpack.c.0.s8 %v613
    %v615 = vperm.slane %v607, %v614
    %v616 = vrot.slane %v464, 4
    %v617 = vsel %vm492, %v616, %v452
    %v618 = vrot.slane %v452, 4
    %v619 = vsel %vm492, %v464, %v618
    %v621 = vunpack.c.l.s4 1983009808
    %v622 = vunpack.c.0.s8 %v621
    %v623 = vperm.slane %v617, %v622
    %v625 = vunpack.c.l.s4 1983009808
    %v626 = vunpack.c.0.s8 %v625
    %v627 = vperm.slane %v619, %v626
    %v628 = vrot.slane %v482, 4
    %v629 = vsel %vm492, %v628, %v470
    %v630 = vrot.slane %v470, 4
    %v631 = vsel %vm492, %v482, %v630
    %v633 = vunpack.c.l.s4 1983009808
    %v634 = vunpack.c.0.s8 %v633
    %v635 = vperm.slane %v629, %v634
    %v637 = vunpack.c.l.s4 1983009808
    %v638 = vunpack.c.0.s8 %v637
    %v639 = vperm.slane %v631, %v638
    %v640 = vrot.slane %v488, 4
    %v641 = vsel %vm492, %v640, %v476
    %v642 = vrot.slane %v476, 4
    %v643 = vsel %vm492, %v488, %v642
    %v645 = vunpack.c.l.s4 1983009808
    %v646 = vunpack.c.0.s8 %v645
    %v647 = vperm.slane %v641, %v646
    %v649 = vunpack.c.l.s4 1983009808
    %v650 = vunpack.c.0.s8 %v649
    %v651 = vperm.slane %v643, %v650
    %v652 = vrot.slane %v623, 4
    %v653 = vsel %vm492, %v652, %v611
    %v654 = vrot.slane %v611, 4
    %v655 = vsel %vm492, %v623, %v654
    %v657 = vunpack.c.l.s4 1934713408
    %v658 = vunpack.c.0.s8 %v657
    %v659 = vperm.slane %v653, %v658
    %v661 = vunpack.c.l.s4 1934713408
    %v662 = vunpack.c.0.s8 %v661
    %v663 = vperm.slane %v655, %v662
    %v664 = vrot.slane %v627, 4
    %v665 = vsel %vm492, %v664, %v615
    %v666 = vrot.slane %v615, 4
    %v667 = vsel %vm492, %v627, %v666
    %v669 = vunpack.c.l.s4 1934713408
    %v670 = vunpack.c.0.s8 %v669
    %v671 = vperm.slane %v665, %v670
    %v673 = vunpack.c.l.s4 1934713408
    %v674 = vunpack.c.0.s8 %v673
    %v675 = vperm.slane %v667, %v674
    %v676 = vrot.slane %v647, 4
    %v677 = vsel %vm492, %v676, %v635
    %v678 = vrot.slane %v635, 4
    %v679 = vsel %vm492, %v647, %v678
    %v681 = vunpack.c.l.s4 1934713408
    %v682 = vunpack.c.0.s8 %v681
    %v683 = vperm.slane %v677, %v682
    %v685 = vunpack.c.l.s4 1934713408
    %v686 = vunpack.c.0.s8 %v685
    %v687 = vperm.slane %v679, %v686
    %v688 = vrot.slane %v651, 4
    %v689 = vsel %vm492, %v688, %v639
    %v690 = vrot.slane %v639, 4
    %v691 = vsel %vm492, %v651, %v690
    %v693 = vunpack.c.l.s4 1934713408
    %v694 = vunpack.c.0.s8 %v693
    %v695 = vperm.slane %v689, %v694
    %v697 = vunpack.c.l.s4 1934713408
    %v698 = vunpack.c.0.s8 %v697
    %v699 = vperm.slane %v691, %v698
    %v700 = vrot.slane %v683, 4
    %v701 = vsel %vm492, %v700, %v659
    %v702 = vrot.slane %v659, 4
    %v703 = vsel %vm492, %v683, %v702
    %v704 = vrot.slane %v687, 4
    %v705 = vsel %vm492, %v704, %v663
    %v706 = vrot.slane %v663, 4
    %v707 = vsel %vm492, %v687, %v706
    %v708 = vrot.slane %v695, 4
    %v709 = vsel %vm492, %v708, %v671
    %v710 = vrot.slane %v671, 4
    %v711 = vsel %vm492, %v695, %v710
    %v712 = vrot.slane %v699, 4
    %v713 = vsel %vm492, %v712, %v675
    %v714 = vrot.slane %v675, 4
    %v715 = vsel %vm492, %v699, %v714
    %vm716 = vcmask 130048
    %v717 = vsel %vm716, %v589, -inf
    %718 = vmax.xlane.f32.xlu0 %v717
    %v719 = vpop.xlane.xlu0 %718
    %v720 = vsel %vm716, %v591, -inf
    %721 = vmax.xlane.f32.xlu0 %v720
    %v722 = vpop.xlane.xlu0 %721
    %v723 = vsel %vm716, %v593, -inf
    %724 = vmax.xlane.f32.xlu0 %v723
    %v725 = vpop.xlane.xlu0 %724
    %v726 = vsel %vm716, %v595, -inf
    %727 = vmax.xlane.f32.xlu0 %v726
    %v728 = vpop.xlane.xlu0 %727
    %v729 = vsel %vm716, %v597, -inf
    %730 = vmax.xlane.f32.xlu0 %v729
    %v731 = vpop.xlane.xlu0 %730
    %v732 = vsel %vm716, %v599, -inf
    %733 = vmax.xlane.f32.xlu0 %v732
    %v734 = vpop.xlane.xlu0 %733
    %v735 = vsel %vm716, %v601, -inf
    %736 = vmax.xlane.f32.xlu0 %v735
    %v737 = vpop.xlane.xlu0 %736
    %v738 = vsel %vm716, %v603, -inf
    %739 = vmax.xlane.f32.xlu0 %v738
    %v740 = vpop.xlane.xlu0 %739
    %v741 = vsel %vm716, %v701, -inf
    %742 = vmax.xlane.f32.xlu0 %v741
    %v743 = vpop.xlane.xlu0 %742
    %v744 = vsel %vm716, %v703, -inf
    %745 = vmax.xlane.f32.xlu0 %v744
    %v746 = vpop.xlane.xlu0 %745
    %v747 = vsel %vm716, %v705, -inf
    %748 = vmax.xlane.f32.xlu0 %v747
    %v749 = vpop.xlane.xlu0 %748
    %v750 = vsel %vm716, %v707, -inf
    %751 = vmax.xlane.f32.xlu0 %v750
    %v752 = vpop.xlane.xlu0 %751
    %v753 = vsel %vm716, %v709, -inf
    %754 = vmax.xlane.f32.xlu0 %v753
    %v755 = vpop.xlane.xlu0 %754
    %v756 = vsel %vm716, %v711, -inf
    %757 = vmax.xlane.f32.xlu0 %v756
    %v758 = vpop.xlane.xlu0 %757
    %v759 = vsel %vm716, %v713, -inf
    %760 = vmax.xlane.f32.xlu0 %v759
    %v761 = vpop.xlane.xlu0 %760
    %v762 = vsel %vm716, %v715, -inf
    %763 = vmax.xlane.f32.xlu0 %v762
    %v764 = vpop.xlane.xlu0 %763
    %v765 = vsub.f32 %v589, %v719
    %v766 = vsub.f32 %v591, %v722
    %v767 = vsub.f32 %v593, %v725
    %v768 = vsub.f32 %v595, %v728
    %v769 = vsub.f32 %v597, %v731
    %v770 = vsub.f32 %v599, %v734
    %v771 = vsub.f32 %v601, %v737
    %v772 = vsub.f32 %v603, %v740
    %v773 = vsub.f32 %v701, %v743
    %v774 = vsub.f32 %v703, %v746
    %v775 = vsub.f32 %v705, %v749
    %v776 = vsub.f32 %v707, %v752
    %v777 = vsub.f32 %v709, %v755
    %v778 = vsub.f32 %v711, %v758
    %v779 = vsub.f32 %v713, %v761
    %v780 = vsub.f32 %v715, %v764
    %v781 = vmul.f32 %v765, 1.442695
    %v782 = vpow.pop %v781
    %v783 = vmul.f32 %v766, 1.442695
    %v784 = vpow.pop %v783
    %v785 = vmul.f32 %v767, 1.442695
    %v786 = vpow.pop %v785
    %v787 = vmul.f32 %v768, 1.442695
    %v788 = vpow.pop %v787
    %v789 = vmul.f32 %v769, 1.442695
    %v790 = vpow.pop %v789
    %v791 = vmul.f32 %v770, 1.442695
    %v792 = vpow.pop %v791
    %v793 = vmul.f32 %v771, 1.442695
    %v794 = vpow.pop %v793
    %v795 = vmul.f32 %v772, 1.442695
    %v796 = vpow.pop %v795
    %v797 = vmul.f32 %v773, 1.442695
    %v798 = vpow.pop %v797
    %v799 = vmul.f32 %v774, 1.442695
    %v800 = vpow.pop %v799
    %v801 = vmul.f32 %v775, 1.442695
    %v802 = vpow.pop %v801
    %v803 = vmul.f32 %v776, 1.442695
    %v804 = vpow.pop %v803
    %v805 = vmul.f32 %v777, 1.442695
    %v806 = vpow.pop %v805
    %v807 = vmul.f32 %v778, 1.442695
    %v808 = vpow.pop %v807
    %v809 = vmul.f32 %v779, 1.442695
    %v810 = vpow.pop %v809
    %v811 = vmul.f32 %v780, 1.442695
    %v812 = vpow.pop %v811
    %v813 = vsel %vm716, %v782, 0.0
    %814 = vadd.xlane.f32.xlu0 %v813
    %v815 = vpop.xlane.xlu0 %814
    %v816 = vsel %vm716, %v784, 0.0
    %817 = vadd.xlane.f32.xlu0 %v816
    %v818 = vpop.xlane.xlu0 %817
    %v819 = vsel %vm716, %v786, 0.0
    %820 = vadd.xlane.f32.xlu0 %v819
    %v821 = vpop.xlane.xlu0 %820
    %v822 = vsel %vm716, %v788, 0.0
    %823 = vadd.xlane.f32.xlu0 %v822
    %v824 = vpop.xlane.xlu0 %823
    %v825 = vsel %vm716, %v790, 0.0
    %826 = vadd.xlane.f32.xlu0 %v825
    %v827 = vpop.xlane.xlu0 %826
    %v828 = vsel %vm716, %v792, 0.0
    %829 = vadd.xlane.f32.xlu0 %v828
    %v830 = vpop.xlane.xlu0 %829
    %v831 = vsel %vm716, %v794, 0.0
    %832 = vadd.xlane.f32.xlu0 %v831
    %v833 = vpop.xlane.xlu0 %832
    %v834 = vsel %vm716, %v796, 0.0
    %835 = vadd.xlane.f32.xlu0 %v834
    %v836 = vpop.xlane.xlu0 %835
    %v837 = vsel %vm716, %v798, 0.0
    %838 = vadd.xlane.f32.xlu0 %v837
    %v839 = vpop.xlane.xlu0 %838
    %v840 = vsel %vm716, %v800, 0.0
    %841 = vadd.xlane.f32.xlu0 %v840
    %v842 = vpop.xlane.xlu0 %841
    %v843 = vsel %vm716, %v802, 0.0
    %844 = vadd.xlane.f32.xlu0 %v843
    %v845 = vpop.xlane.xlu0 %844
    %v846 = vsel %vm716, %v804, 0.0
    %847 = vadd.xlane.f32.xlu0 %v846
    %v848 = vpop.xlane.xlu0 %847
    %v849 = vsel %vm716, %v806, 0.0
    %850 = vadd.xlane.f32.xlu0 %v849
    %v851 = vpop.xlane.xlu0 %850
    %v852 = vsel %vm716, %v808, 0.0
    %853 = vadd.xlane.f32.xlu0 %v852
    %v854 = vpop.xlane.xlu0 %853
    %v855 = vsel %vm716, %v810, 0.0
    %856 = vadd.xlane.f32.xlu0 %v855
    %v857 = vpop.xlane.xlu0 %856
    %v858 = vsel %vm716, %v812, 0.0
    %859 = vadd.xlane.f32.xlu0 %v858
    %v860 = vpop.xlane.xlu0 %859
    %v861 = vrcp.pop %v815
    %v862 = vmul.f32 %v815, %v861
    %v863 = vsub.f32 1.0, %v862
    %v864 = vmul.f32 %v861, %v863
    %v865 = vadd.f32 %v861, %v864
    %vm866 = vweird.f32 %v815
    %vm867 = vweird.f32 %v861
    %vm868 = vmor %vm866, %vm867
    %v869 = vsel %vm868, %v861, %v865
    %v870 = vand.u32 2147483647, %v815
    %vm871 = vcmp.eq.f32.partialorder %v870, 8.507059e+37
    %v872 = vand.u32 %v815, 2147483648
    %v873 = vor.u32 1.1754944e-38, %v872
    %v874 = vsel %vm871, %v873, %v869
    %v875 = vmul.f32 %v782, %v874
    %v876 = vrcp.pop %v818
    %v877 = vmul.f32 %v818, %v876
    %v878 = vsub.f32 1.0, %v877
    %v879 = vmul.f32 %v876, %v878
    %v880 = vadd.f32 %v876, %v879
    %vm881 = vweird.f32 %v818
    %vm882 = vweird.f32 %v876
    %vm883 = vmor %vm881, %vm882
    %v884 = vsel %vm883, %v876, %v880
    %v885 = vand.u32 2147483647, %v818
    %vm886 = vcmp.eq.f32.partialorder %v885, 8.507059e+37
    %v887 = vand.u32 %v818, 2147483648
    %v888 = vor.u32 1.1754944e-38, %v887
    %v889 = vsel %vm886, %v888, %v884
    %v890 = vmul.f32 %v784, %v889
    %v891 = vrcp.pop %v821
    %v892 = vmul.f32 %v821, %v891
    %v893 = vsub.f32 1.0, %v892
    %v894 = vmul.f32 %v891, %v893
    %v895 = vadd.f32 %v891, %v894
    %vm896 = vweird.f32 %v821
    %vm897 = vweird.f32 %v891
    %vm898 = vmor %vm896, %vm897
    %v899 = vsel %vm898, %v891, %v895
    %v900 = vand.u32 2147483647, %v821
    %vm901 = vcmp.eq.f32.partialorder %v900, 8.507059e+37
    %v902 = vand.u32 %v821, 2147483648
    %v903 = vor.u32 1.1754944e-38, %v902
    %v904 = vsel %vm901, %v903, %v899
    %v905 = vmul.f32 %v786, %v904
    %v906 = vrcp.pop %v824
    %v907 = vmul.f32 %v824, %v906
    %v908 = vsub.f32 1.0, %v907
    %v909 = vmul.f32 %v906, %v908
    %v910 = vadd.f32 %v906, %v909
    %vm911 = vweird.f32 %v824
    %vm912 = vweird.f32 %v906
    %vm913 = vmor %vm911, %vm912
    %v914 = vsel %vm913, %v906, %v910
    %v915 = vand.u32 2147483647, %v824
    %vm916 = vcmp.eq.f32.partialorder %v915, 8.507059e+37
    %v917 = vand.u32 %v824, 2147483648
    %v918 = vor.u32 1.1754944e-38, %v917
    %v919 = vsel %vm916, %v918, %v914
    %v920 = vmul.f32 %v788, %v919
    %v921 = vrcp.pop %v827
    %v922 = vmul.f32 %v827, %v921
    %v923 = vsub.f32 1.0, %v922
    %v924 = vmul.f32 %v921, %v923
    %v925 = vadd.f32 %v921, %v924
    %vm926 = vweird.f32 %v827
    %vm927 = vweird.f32 %v921
    %vm928 = vmor %vm926, %vm927
    %v929 = vsel %vm928, %v921, %v925
    %v930 = vand.u32 2147483647, %v827
    %vm931 = vcmp.eq.f32.partialorder %v930, 8.507059e+37
    %v932 = vand.u32 %v827, 2147483648
    %v933 = vor.u32 1.1754944e-38, %v932
    %v934 = vsel %vm931, %v933, %v929
    %v935 = vmul.f32 %v790, %v934
    %v936 = vrcp.pop %v830
    %v937 = vmul.f32 %v830, %v936
    %v938 = vsub.f32 1.0, %v937
    %v939 = vmul.f32 %v936, %v938
    %v940 = vadd.f32 %v936, %v939
    %vm941 = vweird.f32 %v830
    %vm942 = vweird.f32 %v936
    %vm943 = vmor %vm941, %vm942
    %v944 = vsel %vm943, %v936, %v940
    %v945 = vand.u32 2147483647, %v830
    %vm946 = vcmp.eq.f32.partialorder %v945, 8.507059e+37
    %v947 = vand.u32 %v830, 2147483648
    %v948 = vor.u32 1.1754944e-38, %v947
    %v949 = vsel %vm946, %v948, %v944
    %v950 = vmul.f32 %v792, %v949
    %v951 = vrcp.pop %v833
    %v952 = vmul.f32 %v833, %v951
    %v953 = vsub.f32 1.0, %v952
    %v954 = vmul.f32 %v951, %v953
    %v955 = vadd.f32 %v951, %v954
    %vm956 = vweird.f32 %v833
    %vm957 = vweird.f32 %v951
    %vm958 = vmor %vm956, %vm957
    %v959 = vsel %vm958, %v951, %v955
    %v960 = vand.u32 2147483647, %v833
    %vm961 = vcmp.eq.f32.partialorder %v960, 8.507059e+37
    %v962 = vand.u32 %v833, 2147483648
    %v963 = vor.u32 1.1754944e-38, %v962
    %v964 = vsel %vm961, %v963, %v959
    %v965 = vmul.f32 %v794, %v964
    %v966 = vrcp.pop %v836
    %v967 = vmul.f32 %v836, %v966
    %v968 = vsub.f32 1.0, %v967
    %v969 = vmul.f32 %v966, %v968
    %v970 = vadd.f32 %v966, %v969
    %vm971 = vweird.f32 %v836
    %vm972 = vweird.f32 %v966
    %vm973 = vmor %vm971, %vm972
    %v974 = vsel %vm973, %v966, %v970
    %v975 = vand.u32 2147483647, %v836
    %vm976 = vcmp.eq.f32.partialorder %v975, 8.507059e+37
    %v977 = vand.u32 %v836, 2147483648
    %v978 = vor.u32 1.1754944e-38, %v977
    %v979 = vsel %vm976, %v978, %v974
    %v980 = vmul.f32 %v796, %v979
    %v981 = vrcp.pop %v839
    %v982 = vmul.f32 %v839, %v981
    %v983 = vsub.f32 1.0, %v982
    %v984 = vmul.f32 %v981, %v983
    %v985 = vadd.f32 %v981, %v984
    %vm986 = vweird.f32 %v839
    %vm987 = vweird.f32 %v981
    %vm988 = vmor %vm986, %vm987
    %v989 = vsel %vm988, %v981, %v985
    %v990 = vand.u32 2147483647, %v839
    %vm991 = vcmp.eq.f32.partialorder %v990, 8.507059e+37
    %v992 = vand.u32 %v839, 2147483648
    %v993 = vor.u32 1.1754944e-38, %v992
    %v994 = vsel %vm991, %v993, %v989
    %v995 = vmul.f32 %v798, %v994
    %v996 = vrcp.pop %v842
    %v997 = vmul.f32 %v842, %v996
    %v998 = vsub.f32 1.0, %v997
    %v999 = vmul.f32 %v996, %v998
    %v1000 = vadd.f32 %v996, %v999
    %vm1001 = vweird.f32 %v842
    %vm1002 = vweird.f32 %v996
    %vm1003 = vmor %vm1001, %vm1002
    %v1004 = vsel %vm1003, %v996, %v1000
    %v1005 = vand.u32 2147483647, %v842
    %vm1006 = vcmp.eq.f32.partialorder %v1005, 8.507059e+37
    %v1007 = vand.u32 %v842, 2147483648
    %v1008 = vor.u32 1.1754944e-38, %v1007
    %v1009 = vsel %vm1006, %v1008, %v1004
    %v1010 = vmul.f32 %v800, %v1009
    %v1011 = vrcp.pop %v845
    %v1012 = vmul.f32 %v845, %v1011
    %v1013 = vsub.f32 1.0, %v1012
    %v1014 = vmul.f32 %v1011, %v1013
    %v1015 = vadd.f32 %v1011, %v1014
    %vm1016 = vweird.f32 %v845
    %vm1017 = vweird.f32 %v1011
    %vm1018 = vmor %vm1016, %vm1017
    %v1019 = vsel %vm1018, %v1011, %v1015
    %v1020 = vand.u32 2147483647, %v845
    %vm1021 = vcmp.eq.f32.partialorder %v1020, 8.507059e+37
    %v1022 = vand.u32 %v845, 2147483648
    %v1023 = vor.u32 1.1754944e-38, %v1022
    %v1024 = vsel %vm1021, %v1023, %v1019
    %v1025 = vmul.f32 %v802, %v1024
    %v1026 = vrcp.pop %v848
    %v1027 = vmul.f32 %v848, %v1026
    %v1028 = vsub.f32 1.0, %v1027
    %v1029 = vmul.f32 %v1026, %v1028
    %v1030 = vadd.f32 %v1026, %v1029
    %vm1031 = vweird.f32 %v848
    %vm1032 = vweird.f32 %v1026
    %vm1033 = vmor %vm1031, %vm1032
    %v1034 = vsel %vm1033, %v1026, %v1030
    %v1035 = vand.u32 2147483647, %v848
    %vm1036 = vcmp.eq.f32.partialorder %v1035, 8.507059e+37
    %v1037 = vand.u32 %v848, 2147483648
    %v1038 = vor.u32 1.1754944e-38, %v1037
    %v1039 = vsel %vm1036, %v1038, %v1034
    %v1040 = vmul.f32 %v804, %v1039
    %v1041 = vrcp.pop %v851
    %v1042 = vmul.f32 %v851, %v1041
    %v1043 = vsub.f32 1.0, %v1042
    %v1044 = vmul.f32 %v1041, %v1043
    %v1045 = vadd.f32 %v1041, %v1044
    %vm1046 = vweird.f32 %v851
    %vm1047 = vweird.f32 %v1041
    %vm1048 = vmor %vm1046, %vm1047
    %v1049 = vsel %vm1048, %v1041, %v1045
    %v1050 = vand.u32 2147483647, %v851
    %vm1051 = vcmp.eq.f32.partialorder %v1050, 8.507059e+37
    %v1052 = vand.u32 %v851, 2147483648
    %v1053 = vor.u32 1.1754944e-38, %v1052
    %v1054 = vsel %vm1051, %v1053, %v1049
    %v1055 = vmul.f32 %v806, %v1054
    %v1056 = vrcp.pop %v854
    %v1057 = vmul.f32 %v854, %v1056
    %v1058 = vsub.f32 1.0, %v1057
    %v1059 = vmul.f32 %v1056, %v1058
    %v1060 = vadd.f32 %v1056, %v1059
    %vm1061 = vweird.f32 %v854
    %vm1062 = vweird.f32 %v1056
    %vm1063 = vmor %vm1061, %vm1062
    %v1064 = vsel %vm1063, %v1056, %v1060
    %v1065 = vand.u32 2147483647, %v854
    %vm1066 = vcmp.eq.f32.partialorder %v1065, 8.507059e+37
    %v1067 = vand.u32 %v854, 2147483648
    %v1068 = vor.u32 1.1754944e-38, %v1067
    %v1069 = vsel %vm1066, %v1068, %v1064
    %v1070 = vmul.f32 %v808, %v1069
    %v1071 = vrcp.pop %v857
    %v1072 = vmul.f32 %v857, %v1071
    %v1073 = vsub.f32 1.0, %v1072
    %v1074 = vmul.f32 %v1071, %v1073
    %v1075 = vadd.f32 %v1071, %v1074
    %vm1076 = vweird.f32 %v857
    %vm1077 = vweird.f32 %v1071
    %vm1078 = vmor %vm1076, %vm1077
    %v1079 = vsel %vm1078, %v1071, %v1075
    %v1080 = vand.u32 2147483647, %v857
    %vm1081 = vcmp.eq.f32.partialorder %v1080, 8.507059e+37
    %v1082 = vand.u32 %v857, 2147483648
    %v1083 = vor.u32 1.1754944e-38, %v1082
    %v1084 = vsel %vm1081, %v1083, %v1079
    %v1085 = vmul.f32 %v810, %v1084
    %v1086 = vrcp.pop %v860
    %v1087 = vmul.f32 %v860, %v1086
    %v1088 = vsub.f32 1.0, %v1087
    %v1089 = vmul.f32 %v1086, %v1088
    %v1090 = vadd.f32 %v1086, %v1089
    %vm1091 = vweird.f32 %v860
    %vm1092 = vweird.f32 %v1086
    %vm1093 = vmor %vm1091, %vm1092
    %v1094 = vsel %vm1093, %v1086, %v1090
    %v1095 = vand.u32 2147483647, %v860
    %vm1096 = vcmp.eq.f32.partialorder %v1095, 8.507059e+37
    %v1097 = vand.u32 %v860, 2147483648
    %v1098 = vor.u32 1.1754944e-38, %v1097
    %v1099 = vsel %vm1096, %v1098, %v1094
    %v1100 = vmul.f32 %v812, %v1099
    %v1101 = vrot.slane %v905, 4
    %v1102 = vsel %vm492, %v1101, %v875
    %v1103 = vrot.slane %v875, 4
    %v1104 = vsel %vm492, %v905, %v1103
    %v1106 = vunpack.c.l.s4 1983009808
    %v1107 = vunpack.c.0.s8 %v1106
    %v1108 = vperm.slane %v1102, %v1107
    %v1110 = vunpack.c.l.s4 1983009808
    %v1111 = vunpack.c.0.s8 %v1110
    %v1112 = vperm.slane %v1104, %v1111
    %v1113 = vrot.slane %v920, 4
    %v1114 = vsel %vm492, %v1113, %v890
    %v1115 = vrot.slane %v890, 4
    %v1116 = vsel %vm492, %v920, %v1115
    %v1118 = vunpack.c.l.s4 1983009808
    %v1119 = vunpack.c.0.s8 %v1118
    %v1120 = vperm.slane %v1114, %v1119
    %v1122 = vunpack.c.l.s4 1983009808
    %v1123 = vunpack.c.0.s8 %v1122
    %v1124 = vperm.slane %v1116, %v1123
    %v1125 = vrot.slane %v965, 4
    %v1126 = vsel %vm492, %v1125, %v935
    %v1127 = vrot.slane %v935, 4
    %v1128 = vsel %vm492, %v965, %v1127
    %v1130 = vunpack.c.l.s4 1983009808
    %v1131 = vunpack.c.0.s8 %v1130
    %v1132 = vperm.slane %v1126, %v1131
    %v1134 = vunpack.c.l.s4 1983009808
    %v1135 = vunpack.c.0.s8 %v1134
    %v1136 = vperm.slane %v1128, %v1135
    %v1137 = vrot.slane %v980, 4
    %v1138 = vsel %vm492, %v1137, %v950
    %v1139 = vrot.slane %v950, 4
    %v1140 = vsel %vm492, %v980, %v1139
    %v1142 = vunpack.c.l.s4 1983009808
    %v1143 = vunpack.c.0.s8 %v1142
    %v1144 = vperm.slane %v1138, %v1143
    %v1146 = vunpack.c.l.s4 1983009808
    %v1147 = vunpack.c.0.s8 %v1146
    %v1148 = vperm.slane %v1140, %v1147
    %v1149 = vrot.slane %v1120, 4
    %v1150 = vsel %vm492, %v1149, %v1108
    %v1151 = vrot.slane %v1108, 4
    %v1152 = vsel %vm492, %v1120, %v1151
    %v1154 = vunpack.c.l.s4 1934713408
    %v1155 = vunpack.c.0.s8 %v1154
    %v1156 = vperm.slane %v1150, %v1155
    %v1158 = vunpack.c.l.s4 1934713408
    %v1159 = vunpack.c.0.s8 %v1158
    %v1160 = vperm.slane %v1152, %v1159
    %v1161 = vrot.slane %v1124, 4
    %v1162 = vsel %vm492, %v1161, %v1112
    %v1163 = vrot.slane %v1112, 4
    %v1164 = vsel %vm492, %v1124, %v1163
    %v1166 = vunpack.c.l.s4 1934713408
    %v1167 = vunpack.c.0.s8 %v1166
    %v1168 = vperm.slane %v1162, %v1167
    %v1170 = vunpack.c.l.s4 1934713408
    %v1171 = vunpack.c.0.s8 %v1170
    %v1172 = vperm.slane %v1164, %v1171
    %v1173 = vrot.slane %v1144, 4
    %v1174 = vsel %vm492, %v1173, %v1132
    %v1175 = vrot.slane %v1132, 4
    %v1176 = vsel %vm492, %v1144, %v1175
    %v1178 = vunpack.c.l.s4 1934713408
    %v1179 = vunpack.c.0.s8 %v1178
    %v1180 = vperm.slane %v1174, %v1179
    %v1182 = vunpack.c.l.s4 1934713408
    %v1183 = vunpack.c.0.s8 %v1182
    %v1184 = vperm.slane %v1176, %v1183
    %v1185 = vrot.slane %v1148, 4
    %v1186 = vsel %vm492, %v1185, %v1136
    %v1187 = vrot.slane %v1136, 4
    %v1188 = vsel %vm492, %v1148, %v1187
    %v1190 = vunpack.c.l.s4 1934713408
    %v1191 = vunpack.c.0.s8 %v1190
    %v1192 = vperm.slane %v1186, %v1191
    %v1194 = vunpack.c.l.s4 1934713408
    %v1195 = vunpack.c.0.s8 %v1194
    %v1196 = vperm.slane %v1188, %v1195
    %v1197 = vrot.slane %v1180, 4
    %v1198 = vsel %vm492, %v1197, %v1156
    %v1199 = vrot.slane %v1156, 4
    %v1200 = vsel %vm492, %v1180, %v1199
    %v1201 = vrot.slane %v1184, 4
    %v1202 = vsel %vm492, %v1201, %v1160
    %v1203 = vrot.slane %v1160, 4
    %v1204 = vsel %vm492, %v1184, %v1203
    %v1205 = vrot.slane %v1192, 4
    %v1206 = vsel %vm492, %v1205, %v1168
    %v1207 = vrot.slane %v1168, 4
    %v1208 = vsel %vm492, %v1192, %v1207
    %v1209 = vrot.slane %v1196, 4
    %v1210 = vsel %vm492, %v1209, %v1172
    %v1211 = vrot.slane %v1172, 4
    %v1212 = vsel %vm492, %v1196, %v1211
    %v1213 = vrot.slane %v1025, 4
    %v1214 = vsel %vm492, %v1213, %v995
    %v1215 = vrot.slane %v995, 4
    %v1216 = vsel %vm492, %v1025, %v1215
    %v1218 = vunpack.c.l.s4 1983009808
    %v1219 = vunpack.c.0.s8 %v1218
    %v1220 = vperm.slane %v1214, %v1219
    %v1222 = vunpack.c.l.s4 1983009808
    %v1223 = vunpack.c.0.s8 %v1222
    %v1224 = vperm.slane %v1216, %v1223
    %v1225 = vrot.slane %v1040, 4
    %v1226 = vsel %vm492, %v1225, %v1010
    %v1227 = vrot.slane %v1010, 4
    %v1228 = vsel %vm492, %v1040, %v1227
    %v1230 = vunpack.c.l.s4 1983009808
    %v1231 = vunpack.c.0.s8 %v1230
    %v1232 = vperm.slane %v1226, %v1231
    %v1234 = vunpack.c.l.s4 1983009808
    %v1235 = vunpack.c.0.s8 %v1234
    %v1236 = vperm.slane %v1228, %v1235
    %v1237 = vrot.slane %v1085, 4
    %v1238 = vsel %vm492, %v1237, %v1055
    %v1239 = vrot.slane %v1055, 4
    %v1240 = vsel %vm492, %v1085, %v1239
    %v1242 = vunpack.c.l.s4 1983009808
    %v1243 = vunpack.c.0.s8 %v1242
    %v1244 = vperm.slane %v1238, %v1243
    %v1246 = vunpack.c.l.s4 1983009808
    %v1247 = vunpack.c.0.s8 %v1246
    %v1248 = vperm.slane %v1240, %v1247
    %v1249 = vrot.slane %v1100, 4
    %v1250 = vsel %vm492, %v1249, %v1070
    %v1251 = vrot.slane %v1070, 4
    %v1252 = vsel %vm492, %v1100, %v1251
    %v1254 = vunpack.c.l.s4 1983009808
    %v1255 = vunpack.c.0.s8 %v1254
    %v1256 = vperm.slane %v1250, %v1255
    %v1258 = vunpack.c.l.s4 1983009808
    %v1259 = vunpack.c.0.s8 %v1258
    %v1260 = vperm.slane %v1252, %v1259
    %v1261 = vrot.slane %v1232, 4
    %v1262 = vsel %vm492, %v1261, %v1220
    %v1263 = vrot.slane %v1220, 4
    %v1264 = vsel %vm492, %v1232, %v1263
    %v1266 = vunpack.c.l.s4 1934713408
    %v1267 = vunpack.c.0.s8 %v1266
    %v1268 = vperm.slane %v1262, %v1267
    %v1270 = vunpack.c.l.s4 1934713408
    %v1271 = vunpack.c.0.s8 %v1270
    %v1272 = vperm.slane %v1264, %v1271
    %v1273 = vrot.slane %v1236, 4
    %v1274 = vsel %vm492, %v1273, %v1224
    %v1275 = vrot.slane %v1224, 4
    %v1276 = vsel %vm492, %v1236, %v1275
    %v1278 = vunpack.c.l.s4 1934713408
    %v1279 = vunpack.c.0.s8 %v1278
    %v1280 = vperm.slane %v1274, %v1279
    %v1282 = vunpack.c.l.s4 1934713408
    %v1283 = vunpack.c.0.s8 %v1282
    %v1284 = vperm.slane %v1276, %v1283
    %v1285 = vrot.slane %v1256, 4
    %v1286 = vsel %vm492, %v1285, %v1244
    %v1287 = vrot.slane %v1244, 4
    %v1288 = vsel %vm492, %v1256, %v1287
    %v1290 = vunpack.c.l.s4 1934713408
    %v1291 = vunpack.c.0.s8 %v1290
    %v1292 = vperm.slane %v1286, %v1291
    %v1294 = vunpack.c.l.s4 1934713408
    %v1295 = vunpack.c.0.s8 %v1294
    %v1296 = vperm.slane %v1288, %v1295
    %v1297 = vrot.slane %v1260, 4
    %v1298 = vsel %vm492, %v1297, %v1248
    %v1299 = vrot.slane %v1248, 4
    %v1300 = vsel %vm492, %v1260, %v1299
    %v1302 = vunpack.c.l.s4 1934713408
    %v1303 = vunpack.c.0.s8 %v1302
    %v1304 = vperm.slane %v1298, %v1303
    %v1306 = vunpack.c.l.s4 1934713408
    %v1307 = vunpack.c.0.s8 %v1306
    %v1308 = vperm.slane %v1300, %v1307
    %v1309 = vrot.slane %v1292, 4
    %v1310 = vsel %vm492, %v1309, %v1268
    %v1311 = vrot.slane %v1268, 4
    %v1312 = vsel %vm492, %v1292, %v1311
    %v1313 = vrot.slane %v1296, 4
    %v1314 = vsel %vm492, %v1313, %v1272
    %v1315 = vrot.slane %v1272, 4
    %v1316 = vsel %vm492, %v1296, %v1315
    %v1317 = vrot.slane %v1304, 4
    %v1318 = vsel %vm492, %v1317, %v1280
    %v1319 = vrot.slane %v1280, 4
    %v1320 = vsel %vm492, %v1304, %v1319
    %v1321 = vrot.slane %v1308, 4
    %v1322 = vsel %vm492, %v1321, %v1284
    %v1323 = vrot.slane %v1284, 4
    %v1324 = vsel %vm492, %v1308, %v1323
    %1327 = vrot.lane.b32.xlu0 %v1200, 16
    %v1328 = vpop.permute.xlu0 %1327
    %1329 = vrot.lane.b32.xlu0 %v1312, 16
    %v1330 = vpop.permute.xlu0 %1329
    %1335 = vrot.lane.b32.xlu0 %v1202, 32
    %v1336 = vpop.permute.xlu0 %1335
    %1337 = vrot.lane.b32.xlu0 %v1314, 32
    %v1338 = vpop.permute.xlu0 %1337
    %1343 = vrot.lane.b32.xlu0 %v1204, 48
    %v1344 = vpop.permute.xlu0 %1343
    %1345 = vrot.lane.b32.xlu0 %v1316, 48
    %v1346 = vpop.permute.xlu0 %1345
    %1351 = vrot.lane.b32.xlu0 %v1206, 64
    %v1352 = vpop.permute.xlu0 %1351
    %1353 = vrot.lane.b32.xlu0 %v1318, 64
    %v1354 = vpop.permute.xlu0 %1353
    %1359 = vrot.lane.b32.xlu0 %v1208, 80
    %v1360 = vpop.permute.xlu0 %1359
    %1361 = vrot.lane.b32.xlu0 %v1320, 80
    %v1362 = vpop.permute.xlu0 %1361
    %1367 = vrot.lane.b32.xlu0 %v1210, 96
    %v1368 = vpop.permute.xlu0 %1367
    %1369 = vrot.lane.b32.xlu0 %v1322, 96
    %v1370 = vpop.permute.xlu0 %1369
    %1375 = vrot.lane.b32.xlu0 %v1212, 112
    %v1376 = vpop.permute.xlu0 %1375
    %1377 = vrot.lane.b32.xlu0 %v1324, 112
    %v1378 = vpop.permute.xlu0 %1377
    %v1381 = vsel %vm716, %v1198, %v1328
    %v1382 = vsel %vm716, %v1310, %v1330
    %vm1383 = vcmask 261120
    %v1384 = vsel %vm1383, %v1381, %v1336
    %v1385 = vsel %vm1383, %v1382, %v1338
    %vm1386 = vcmask 392192
    %v1387 = vsel %vm1386, %v1384, %v1344
    %v1388 = vsel %vm1386, %v1385, %v1346
    %v1389 = vsel %vm344, %v1387, %v1352
    %v1390 = vsel %vm344, %v1388, %v1354
    %vm1391 = vcmask 654336
    %v1392 = vsel %vm1391, %v1389, %v1360
    %v1393 = vsel %vm1391, %v1390, %v1362
    %vm1394 = vcmask 785408
    %v1395 = vsel %vm1394, %v1392, %v1368
    %v1396 = vsel %vm1394, %v1393, %v1370
    %vm1397 = vcmask 916480
    %v1398 = vsel %vm1397, %v1395, %v1376
    %v1399 = vsel %vm1397, %v1396, %v1378
    %1400 = vst [vmem:[%s10] sm:$0xff] %v1398
    %1401 = vst [vmem:[%s10 + $0x8] sm:$0xff] %v1399
    %1402 = vst [vmem:[%s11] sm:$0xff] %v270
    %1403 = vst [vmem:[%s11 + $0x8] sm:$0xff] %v272
    // Predicated region
    $region58: #{molecule_vae_forward.1} parent=1 // pred_check
      _
    $region59: #{molecule_vae_forward.1} parent=1 // pred_check_branch
      %1405 = sbr.rel (0) target = $region61
    $region60: #{molecule_vae_forward.1} parent=1 // pred_region
      _
    $region61: #{molecule_vae_forward.1} parent=1 // pred_fallthru
      _
    // Predicated region
    $region62: #{molecule_vae_forward.1} parent=1 // pred_check
      _
    $region63: #{molecule_vae_forward.1} parent=1 // pred_check_branch
      %1407 = sbr.rel (0) target = $region65
    $region64: #{molecule_vae_forward.1} parent=1 // pred_region
      _
    $region65: #{molecule_vae_forward.1} parent=1 // pred_fallthru
      _
    // Predicated region
    $region66: #{molecule_vae_forward.1} parent=1 // pred_check
      _
    $region67: #{molecule_vae_forward.1} parent=1 // pred_check_branch
      %1409 = sbr.rel (0) target = $region69
    $region68: #{molecule_vae_forward.1} parent=1 // pred_region
      _
    $region69: #{molecule_vae_forward.1} parent=1 // pred_fallthru
      _
    // Predicated region
    $region70: #{molecule_vae_forward.1} parent=1 // pred_check
      _
    $region71: #{molecule_vae_forward.1} parent=1 // pred_check_branch
      %1411 = sbr.rel (0) target = $region73
    $region72: #{molecule_vae_forward.1} parent=1 // pred_region
      _
    $region73: #{molecule_vae_forward.1} parent=1 // pred_fallthru
      _
    %1412 = vsyncpa [#allocation3], 1
    %1413 = vsyncpa [#allocation5], 1
    %1414 = vsyncpa [#allocation8], 1

</llo_original>
